<compile_context>
chip_gen: v5e
topology: v5e:2x2
jax: 0.10.0
libtpu: 0.0.40
codegen_flags: <defaults>
</compile_context>

<pallas_src>
from functools import partial

import jax
import jax.numpy as jnp
from jax.experimental import pallas as pl
from jax.experimental.pallas import tpu as pltpu


def _prenorm_layernorm_kernel(x_ref, g_ref, o_ref, *, eps):
    """x_ref: (1, C, T); g_ref: (1, C, 1); o_ref: (1, C, T)."""
    x = x_ref[...].astype(jnp.float32)
    g = g_ref[...].astype(jnp.float32)
    mean = jnp.mean(x, axis=1, keepdims=True)            # XLU sublane reduce
    xc = x - mean
    var = jnp.mean(xc * xc, axis=1, keepdims=True)       # unbiased=False
    inv = jax.lax.rsqrt(var + eps)                       # EUP slot
    o_ref[...] = (xc * inv * g).astype(o_ref.dtype)


def _pick_tile(s, c, bytes_per_elem=4, budget_bytes=2 << 20):
    """Largest multiple of 128 dividing s with a block <= budget (else full s)."""
    if s % 128 != 0:
        return s                       # block == full extent is always legal
    cap = max(128, (budget_bytes // (bytes_per_elem * max(c, 1))) // 128 * 128)
    t = min(s, cap)
    t = (t // 128) * 128
    while s % t != 0:
        t -= 128
    return max(t, 128)


def layer_norm_channel(x, gamma, eps=1e-5):
    """x: (B, C, D, H, W); gamma: (1, C, 1, 1, 1). Returns same shape/dtype as x."""
    B, C, D, H, W = x.shape
    S = D * H * W
    x2 = x.reshape(B, C, S)
    g2 = gamma.reshape(1, C, 1)
    tile_s = _pick_tile(S, C)

    out = pl.pallas_call(
        partial(_prenorm_layernorm_kernel, eps=eps),
        out_shape=jax.ShapeDtypeStruct((B, C, S), x.dtype),
        grid=(B, S // tile_s),
        in_specs=[
            pl.BlockSpec((1, C, tile_s), lambda b, s: (b, 0, s)),
            pl.BlockSpec((1, C, 1), lambda b, s: (0, 0, 0)),
        ],
        out_specs=pl.BlockSpec((1, C, tile_s), lambda b, s: (b, 0, s)),
        compiler_params=pltpu.CompilerParams(
            dimension_semantics=("parallel", "parallel")),
    )(x2, g2)
    return out.reshape(B, C, D, H, W)


def pre_norm(x, gamma, fn=lambda y: y, eps=1e-5):
    """PreNorm forward: fn(LayerNorm(x))."""
    return fn(layer_norm_channel(x, gamma, eps=eps))


def _reference_prenorm(x, gamma, eps=1e-5):
    """Pure-JAX reference mirroring the PyTorch LayerNorm over the channel dim."""
    mean = jnp.mean(x, axis=1, keepdims=True)
    var = jnp.mean((x - mean) ** 2, axis=1, keepdims=True)
    return (x - mean) / jnp.sqrt(var + eps) * gamma


if __name__ == "__main__":
    key = jax.random.PRNGKey(0)
    kx, kg = jax.random.split(key)

    B, C, D, H, W = 2, 4, 8, 16, 16
    x = jax.random.normal(kx, (B, C, D, H, W), dtype=jnp.float32)
    # gamma init is ones in the module; perturb it to exercise the scaling path
    gamma = 1.0 + 0.1 * jax.random.normal(kg, (1, C, 1, 1, 1), dtype=jnp.float32)

    out = pre_norm(x, gamma)          # fn = identity
    out = jax.block_until_ready(out)

    assert out.shape == (B, C, D, H, W), out.shape
    ref = _reference_prenorm(x, gamma)
    max_err = float(jnp.max(jnp.abs(out - ref)))
    assert jnp.allclose(out, ref, atol=1e-4, rtol=1e-5), max_err

    print("KERNEL_OK")
</pallas_src>

<mosaic_0001>
module attributes {stable_mosaic.version = 11 : i64} {
  func.func @_prenorm_layernorm_kernel(%arg0: i32, %arg1: i32, %arg2: memref<1x4x2048xf32, #tpu.memory_space<vmem>>, %arg3: memref<1x4x1xf32, #tpu.memory_space<vmem>>, %arg4: memref<1x4x2048xf32, #tpu.memory_space<vmem>>) attributes {dimension_semantics = [#tpu.dimension_semantics<parallel>, #tpu.dimension_semantics<parallel>], iteration_bounds = array<i64: 2, 1>, scalar_prefetch = 0 : i64, scratch_operands = 0 : i64, tpu.core_type = #tpu.core_type<tc>, window_params = [{transform_indices = @transform_0, window_bounds = array<i64: 1, 4, 2048>}, {pipeline_mode = #tpu.pipeline_mode<synchronous>, transform_indices = @transform_1, window_bounds = array<i64: 1, 4, 1>}, {transform_indices = @transform_2, window_bounds = array<i64: 1, 4, 2048>}]} {
    %c0 = arith.constant 0 : index
    %c0_0 = arith.constant 0 : index
    %c0_1 = arith.constant 0 : index
    %0 = vector.load %arg2[%c0, %c0_0, %c0_1] : memref<1x4x2048xf32, #tpu.memory_space<vmem>>, vector<1x4x2048xf32>
    %c0_2 = arith.constant 0 : index
    %c0_3 = arith.constant 0 : index
    %c0_4 = arith.constant 0 : index
    %1 = vector.load %arg3[%c0_2, %c0_3, %c0_4] : memref<1x4x1xf32, #tpu.memory_space<vmem>>, vector<1x4x1xf32>
    %cst = arith.constant dense<0.000000e+00> : vector<1x2048xf32>
    %2 = vector.multi_reduction <add>, %0, %cst [1] : vector<1x4x2048xf32> to vector<1x2048xf32>
    %3 = vector.shape_cast %2 : vector<1x2048xf32> to vector<1x1x2048xf32>
    %cst_5 = arith.constant 4.000000e+00 : f32
    %4 = vector.broadcast %cst_5 : f32 to vector<1x1x2048xf32>
    %5 = arith.divf %3, %4 : vector<1x1x2048xf32>
    %6 = vector.broadcast %5 : vector<1x1x2048xf32> to vector<1x4x2048xf32>
    %7 = arith.subf %0, %6 : vector<1x4x2048xf32>
    %8 = arith.mulf %7, %7 : vector<1x4x2048xf32>
    %cst_6 = arith.constant dense<0.000000e+00> : vector<1x2048xf32>
    %9 = vector.multi_reduction <add>, %8, %cst_6 [1] : vector<1x4x2048xf32> to vector<1x2048xf32>
    %10 = vector.shape_cast %9 : vector<1x2048xf32> to vector<1x1x2048xf32>
    %cst_7 = arith.constant 4.000000e+00 : f32
    %11 = vector.broadcast %cst_7 : f32 to vector<1x1x2048xf32>
    %12 = arith.divf %10, %11 : vector<1x1x2048xf32>
    %cst_8 = arith.constant 9.99999974E-6 : f32
    %13 = vector.broadcast %cst_8 : f32 to vector<1x1x2048xf32>
    %14 = arith.addf %12, %13 : vector<1x1x2048xf32>
    %15 = math.rsqrt %14 : vector<1x1x2048xf32>
    %16 = vector.broadcast %15 : vector<1x1x2048xf32> to vector<1x4x2048xf32>
    %17 = arith.mulf %7, %16 : vector<1x4x2048xf32>
    %18 = vector.broadcast %1 : vector<1x4x1xf32> to vector<1x4x2048xf32>
    %19 = arith.mulf %17, %18 : vector<1x4x2048xf32>
    %c0_9 = arith.constant 0 : index
    %c0_10 = arith.constant 0 : index
    %c0_11 = arith.constant 0 : index
    %20 = vector.load %arg4[%c0_9, %c0_10, %c0_11] : memref<1x4x2048xf32, #tpu.memory_space<vmem>>, vector<1x4x2048xf32>
    tpu.vector_store %arg4[%c0_9, %c0_10, %c0_11], %19 {strides = array<i32>} : memref<1x4x2048xf32, #tpu.memory_space<vmem>>, vector<1x4x2048xf32>,
    return
  }
  func.func @transform_0(%arg0: i32, %arg1: i32) -> (i32, i32, i32) {
    %c0_i32 = arith.constant 0 : i32
    %c0_i32_0 = arith.constant 0 : i32
    return %arg0, %c0_i32, %arg1 : i32, i32, i32
  }
  func.func @transform_1(%arg0: i32, %arg1: i32) -> (i32, i32, i32) {
    %c0_i32 = arith.constant 0 : i32
    %c0_i32_0 = arith.constant 0 : i32
    %c0_i32_1 = arith.constant 0 : i32
    %c0_i32_2 = arith.constant 0 : i32
    return %c0_i32, %c0_i32_0, %c0_i32_1 : i32, i32, i32
  }
  func.func @transform_2(%arg0: i32, %arg1: i32) -> (i32, i32, i32) {
    %c0_i32 = arith.constant 0 : i32
    %c0_i32_0 = arith.constant 0 : i32
    return %arg0, %c0_i32, %arg1 : i32, i32, i32
  }
}

</mosaic_0001>

<llo_original>
// kernel: tpu_custom_call.1
$region0: #{tpu_custom_call.1}
  #allocation0 [shape = 'u32[]', space=smem, size = 0x4, offset = 0x4, fixed_abs, tag = 'smem constant byte address 0x4 - core index']
  #allocation1 [shape = 'u32[72,128]{1,0:T(1,128)}', space=vmem, size = 0x9000, scoped, tag = 'internal scratch']
  %s0 = inlined_call_operand.hbm [shape: f32[2,4,2048], index: 0, kind: input, shape index: {}]
  %s1 = inlined_call_operand.vmem [shape: f32[1,4,1], index: 1, kind: input, shape index: {}]
  %s2 = inlined_call_operand.hbm [shape: f32[2,4,2048], index: 2, kind: output, shape index: {}]
  %s3 = sld [smem:[#allocation0]]
  $region45: #{tpu_custom_call.1} parent=0
    _
  %s5 = ssub.s32 1, %s3
  %s6 = scalar_select 0, %s5, %s3
  $region1: #{tpu_custom_call.1} parent=0
    #allocation2 [shape = 'u8[65536]{0}', space=vmem, size = 0x10000, scoped, tag = 'input window, operand 0']
    #allocation3 [shape = 's32[2]{0}', space=sflag, size = 0x8, scoped, tag = 'scoped memory for tpu_custom_call.1']
    #allocation4 [shape = 's32[2]{0}', space=sflag, size = 0x8, scoped, tag = 'scoped memory for tpu_custom_call.1']
    #allocation5 [shape = 'u8[65536]{0}', space=vmem, size = 0x10000, scoped, tag = 'output window, operand 0']
    %7 = vsyncpa [#allocation3], 0
    %s8 = scalar_lea.sflag [#allocation3], 1
    %9 = vsyncpa %s8, 0
    %10 = vsyncpa [#allocation4], 0
    %s11 = scalar_lea.sflag [#allocation4], 1
    %12 = vsyncpa %s11, 0
    loop: start=0, step=1, limit=4
    $region2: #{tpu_custom_call.1} parent=1 // loop_pre_header
      _
    $region3: #{tpu_custom_call.1} parent=1 // loop_header
      %s14 = sphi 0, %s18
      %p15 = scmp.ge.s32.totalorder %s14, 4
      %s21 = sphi 0, %s33
      %s22 = sphi 0, %s29
      %s23 = sphi 0, %s21
      %s24 = sphi 0, %s22
      %s25 = sphi 0, %s23
      %s26 = sphi 0, %s24
      %s38 = sphi 0, %s40
      %s41 = sphi 0, %s38
      %s42 = sphi 0, %s41
      %s58 = sphi 0, %s42
      %s62 = sphi 0, %s62
      %s64 = sphi 0, %s62
      %s65 = sphi 0, %s64
      %s79 = sphi 0, %s65
      %s87 = sphi 0, %s89
      %s90 = sphi 0, %s87
      %s91 = sphi 0, %s90
      %s107 = sphi 0, %s91
    $region4: #{tpu_custom_call.1} parent=1 // loop_header_branch
      %17 = sbr.rel (%p15) target = $region8
    $region5: #{tpu_custom_call.1} parent=1 // loop_body
      %s19 = ssub.s32 %s14, 1
      %s20 = ssub.s32 %s14, 2
      %s27 = sadd.s32 1, %s22
      %p28 = scmp.ge.s32.totalorder %s27, 1
      %s29 = scalar_select %p28, 0, %s27
      %s30 = sadd.s32 1, %s21
      %s31 = scalar_select %p28, %s30, %s21
      %p32 = scmp.ge.s32.totalorder %s31, 2
      %s33 = scalar_select %p32, 0, %s31
      %s34 = ssub.s32 %s21, %s33
      %s35 = ssub.s32 %s22, %s29
      %s36 = sor.u32 %s34, %s35
      %p37 = scmp.eq.s32.totalorder %s36, 0
      %s39 = sadd.s32 %s38, 1
      %s40 = scalar_select %p37, %s38, %s39
      %p43 = pneg %p37
      %p44 = scmp.eq.s32.totalorder %s14, 1
      %p45 = por %p43, %p44
      %p46 = scmp.ne.s32.totalorder %s38, %s41
      %p47 = scmp.eq.s32.totalorder %s14, 0
      %p48 = por %p46, %p47
      %p49 = scmp.ne.s32.totalorder %s38, %s41
      %p50 = scmp.eq.s32.totalorder %s19, 1
      %p51 = por %p49, %p50
      %p52 = scmp.ne.s32.totalorder %s41, %s42
      %p53 = scmp.eq.s32.totalorder %s19, 0
      %p54 = por %p52, %p53
      %p55 = scmp.ne.s32.totalorder %s41, %s42
      %p56 = scmp.eq.s32.totalorder %s20, 1
      %p57 = por %p55, %p56
      %p59 = scmp.ne.s32.totalorder %s42, %s58
      %p60 = scmp.eq.s32.totalorder %s20, 0
      %p61 = por %p59, %p60
      %s63 = sadd.s32 %s62, 1
      %p66 = scmp.eq.s32.totalorder %s14, 1
      %p67 = scmp.ne.s32.totalorder %s62, %s64
      %p68 = scmp.eq.s32.totalorder %s14, 0
      %p69 = por %p67, %p68
      %p70 = scmp.ne.s32.totalorder %s62, %s64
      %p71 = scmp.eq.s32.totalorder %s19, 1
      %p72 = por %p70, %p71
      %p73 = scmp.ne.s32.totalorder %s64, %s65
      %p74 = scmp.eq.s32.totalorder %s19, 0
      %p75 = por %p73, %p74
      %p76 = scmp.ne.s32.totalorder %s64, %s65
      %p77 = scmp.eq.s32.totalorder %s20, 1
      %p78 = por %p76, %p77
      %p80 = scmp.ne.s32.totalorder %s65, %s79
      %p81 = scmp.eq.s32.totalorder %s20, 0
      %p82 = por %p80, %p81
      %s83 = ssub.s32 %s21, %s33
      %s84 = ssub.s32 %s22, %s29
      %s85 = sor.u32 %s83, %s84
      %p86 = scmp.eq.s32.totalorder %s85, 0
      %s88 = sadd.s32 %s87, 1
      %s89 = scalar_select %p86, %s87, %s88
      %p92 = pneg %p86
      %p93 = scmp.eq.s32.totalorder %s14, 1
      %p94 = por %p92, %p93
      %p95 = scmp.ne.s32.totalorder %s87, %s90
      %p96 = scmp.eq.s32.totalorder %s14, 0
      %p97 = por %p95, %p96
      %p98 = scmp.ne.s32.totalorder %s87, %s90
      %p99 = scmp.eq.s32.totalorder %s19, 1
      %p100 = por %p98, %p99
      %p101 = scmp.ne.s32.totalorder %s90, %s91
      %p102 = scmp.eq.s32.totalorder %s19, 0
      %p103 = por %p101, %p102
      %p104 = scmp.ne.s32.totalorder %s90, %s91
      %p105 = scmp.eq.s32.totalorder %s20, 1
      %p106 = por %p104, %p105
      %p108 = scmp.ne.s32.totalorder %s91, %s107
      %p109 = scmp.eq.s32.totalorder %s20, 0
      %p110 = por %p108, %p109
      %p111 = scmp.le.s32.totalorder 1, %s14
      %p112 = scmp.lt.s32.totalorder %s14, 3
      %p113 = pnand %p111, %p112
      %p114 = pneg %p113
      // Predicated region
      $region9: #{tpu_custom_call.1} parent=5 // pred_check
        _
      $region10: #{tpu_custom_call.1} parent=5 // pred_check_branch
        %116 = sbr.rel (%p113) target = $region12
      $region11: #{tpu_custom_call.1} parent=5 // pred_region
        %s117 = ssub.s32 %s14, 1
        // Predicated region
        $region13: #{tpu_custom_call.1} parent=11 // pred_check
          %p118 = pneg %p75
        $region14: #{tpu_custom_call.1} parent=11 // pred_check_branch
          %120 = sbr.rel (%p118) target = $region16
        $region15: #{tpu_custom_call.1} parent=11 // pred_region
          _
        $region16: #{tpu_custom_call.1} parent=11 // pred_fallthru
          _
      $region12: #{tpu_custom_call.1} parent=5 // pred_fallthru
        _
      %p121 = scmp.lt.s32.totalorder %s14, 2
      // Predicated region
      $region17: #{tpu_custom_call.1} parent=5 // pred_check
        %p122 = pneg %p121
      $region18: #{tpu_custom_call.1} parent=5 // pred_check_branch
        %124 = sbr.rel (%p122) target = $region20
      $region19: #{tpu_custom_call.1} parent=5 // pred_region
        // Predicated region
        $region21: #{tpu_custom_call.1} parent=19 // pred_check
          %p125 = pneg %p48
        $region22: #{tpu_custom_call.1} parent=19 // pred_check_branch
          %127 = sbr.rel (%p125) target = $region24
        $region23: #{tpu_custom_call.1} parent=19 // pred_region
          %s128 = sand.u32 %s38, 1
          %s129 = scalar_lea.sflag [#allocation3], %s128
          %s130 = sand.u32 %s38, 1
          %s131 = smul.addr %s130, 64
          %s132 = scalar_lea.vmem [#allocation2], %s131
          %s133 = smul.u32 16, %s22
          %135 = vsyncadd %s129, 0
          %s136 = smul.addr %s21, 16
          %s137 = sadd.s32 %s133, %s136
          %s138 = smul.addr %s137, 4
          %s139 = scalar_lea.hbm %s0, %s138
          %s141 = sshll.u32 %s139, 4
          %s142 = int_to_ptr.hbm [resolvable:$true] %s141
          %s143 = sshll.u32 %s132, 4
          %s144 = int_to_ptr.vmem [resolvable:$true] %s143
          %146 = dma.hbm_to_vmem [thread:$0]  %s142, 1024, %s144, %s129
        $region24: #{tpu_custom_call.1} parent=19 // pred_fallthru
          _
      $region20: #{tpu_custom_call.1} parent=5 // pred_fallthru
        _
      %p147 = scmp.le.s32.totalorder 1, %s14
      %p148 = scmp.lt.s32.totalorder %s14, 3
      %p149 = pnand %p147, %p148
      %p150 = pneg %p149
      // Predicated region
      $region25: #{tpu_custom_call.1} parent=5 // pred_check
        _
      $region26: #{tpu_custom_call.1} parent=5 // pred_check_branch
        %152 = sbr.rel (%p149) target = $region28
      $region27: #{tpu_custom_call.1} parent=5 // pred_region
        %s153 = ssub.s32 %s14, 1
        %s154 = sand.u32 %s41, 1
        %s155 = scalar_lea.sflag [#allocation3], %s154
        %s156 = sand.u32 %s41, 1
        %s157 = smul.addr %s156, 64
        %s158 = scalar_lea.vmem [#allocation2], %s157
        // Predicated region
        $region29: #{tpu_custom_call.1} parent=27 // pred_check
          %p159 = pneg %p54
        $region30: #{tpu_custom_call.1} parent=27 // pred_check_branch
          %161 = sbr.rel (%p159) target = $region32
        $region31: #{tpu_custom_call.1} parent=27 // pred_region
          %163 = dma.done %s155, 1024
        $region32: #{tpu_custom_call.1} parent=27 // pred_fallthru
          _
        %s164 = sand.u32 %s41, 1
        %s165 = scalar_lea.sflag [#allocation3], %s164
        %s166 = sand.u32 %s41, 1
        %s167 = smul.addr %s166, 64
        %s168 = scalar_lea.vmem [#allocation2], %s167
        %p169 = pneg %p54
        %p170 = pneg %p51
        %p171 = pneg %p75
        %p172 = pneg %p72
        %p173 = pneg %p103
        %p174 = pneg %p100
        %s175 = sand.u32 %s90, 1
        %s176 = scalar_lea.sflag [#allocation4], %s175
        %s177 = sand.u32 %s90, 1
        %s178 = smul.addr %s177, 64
        %s179 = scalar_lea.vmem [#allocation5], %s178
        %s180 = smul.u32 16, %s24
        %s181 = smul.u32 16, %s24
        %v182 = vld [vmem:[%s158] sm:$0xff]
        %v183 = vld [vmem:[%s158 + $0x8] sm:$0xff]
        %v184 = vld [vmem:[%s158 + $0x10] sm:$0xff]
        %v185 = vld [vmem:[%s158 + $0x18] sm:$0xff]
        %v186 = vld [vmem:[%s158 + $0x20] sm:$0xff]
        %v187 = vld [vmem:[%s158 + $0x28] sm:$0xff]
        %v188 = vld [vmem:[%s158 + $0x30] sm:$0xff]
        %v189 = vld [vmem:[%s158 + $0x38] sm:$0xff]
        %v190 = vld [vmem:[%s1] sm:$0xf]
        %199 = vst [vmem:[#allocation1] ss:$2 sm:$0xff] %v182
        %s200 = scalar_lea.vmem [#allocation1], 16
        %201 = vst [vmem:[%s200] ss:$2 sm:$0xff] %v183
        %s202 = scalar_lea.vmem [#allocation1], 32
        %203 = vst [vmem:[%s202] ss:$2 sm:$0xff] %v184
        %s204 = scalar_lea.vmem [#allocation1], 48
        %205 = vst [vmem:[%s204] ss:$2 sm:$0xff] %v185
        %v206 = vld.sshfl [vmem:[#allocation1] sm:$0xff pattern:$0x75316420]
        %v207 = vld.sshfl [vmem:[#allocation1 + $0x8] sm:$0xff pattern:$0x75316420]
        %v208 = vld.sshfl [vmem:[#allocation1 + $0x10] sm:$0xff pattern:$0x75316420]
        %v209 = vld.sshfl [vmem:[#allocation1 + $0x18] sm:$0xff pattern:$0x75316420]
        %v210 = vld.sshfl [vmem:[#allocation1 + $0x20] sm:$0xff pattern:$0x75316420]
        %v211 = vld.sshfl [vmem:[#allocation1 + $0x28] sm:$0xff pattern:$0x75316420]
        %v212 = vld.sshfl [vmem:[#allocation1 + $0x30] sm:$0xff pattern:$0x75316420]
        %v213 = vld.sshfl [vmem:[#allocation1 + $0x38] sm:$0xff pattern:$0x75316420]
        %214 = vst [vmem:[#allocation1] ss:$2 sm:$0xff] %v186
        %215 = vst [vmem:[%s200] ss:$2 sm:$0xff] %v187
        %216 = vst [vmem:[%s202] ss:$2 sm:$0xff] %v188
        %217 = vst [vmem:[%s204] ss:$2 sm:$0xff] %v189
        %v218 = vld.sshfl [vmem:[#allocation1] sm:$0xff pattern:$0x75316420]
        %v219 = vld.sshfl [vmem:[#allocation1 + $0x8] sm:$0xff pattern:$0x75316420]
        %v220 = vld.sshfl [vmem:[#allocation1 + $0x10] sm:$0xff pattern:$0x75316420]
        %v221 = vld.sshfl [vmem:[#allocation1 + $0x18] sm:$0xff pattern:$0x75316420]
        %v222 = vld.sshfl [vmem:[#allocation1 + $0x20] sm:$0xff pattern:$0x75316420]
        %v223 = vld.sshfl [vmem:[#allocation1 + $0x28] sm:$0xff pattern:$0x75316420]
        %v224 = vld.sshfl [vmem:[#allocation1 + $0x30] sm:$0xff pattern:$0x75316420]
        %v225 = vld.sshfl [vmem:[#allocation1 + $0x38] sm:$0xff pattern:$0x75316420]
        %vm242 = vcmask 1043456
        %v243 = vsel %vm242, %v206, 0.0
        %v244 = vrot.slane %v243, 4
        %v245 = vadd.f32 %v243, %v244
        %v246 = vrot.slane %v245, 2
        %v247 = vadd.f32 %v245, %v246
        %v248 = vrot.slane %v247, 1
        %v249 = vadd.f32 %v247, %v248
        %v250 = vsel %vm242, %v207, 0.0
        %v251 = vrot.slane %v250, 4
        %v252 = vadd.f32 %v250, %v251
        %v253 = vrot.slane %v252, 2
        %v254 = vadd.f32 %v252, %v253
        %v255 = vrot.slane %v254, 1
        %v256 = vadd.f32 %v254, %v255
        %v257 = vsel %vm242, %v208, 0.0
        %v258 = vrot.slane %v257, 4
        %v259 = vadd.f32 %v257, %v258
        %v260 = vrot.slane %v259, 2
        %v261 = vadd.f32 %v259, %v260
        %v262 = vrot.slane %v261, 1
        %v263 = vadd.f32 %v261, %v262
        %v264 = vsel %vm242, %v209, 0.0
        %v265 = vrot.slane %v264, 4
        %v266 = vadd.f32 %v264, %v265
        %v267 = vrot.slane %v266, 2
        %v268 = vadd.f32 %v266, %v267
        %v269 = vrot.slane %v268, 1
        %v270 = vadd.f32 %v268, %v269
        %v271 = vsel %vm242, %v210, 0.0
        %v272 = vrot.slane %v271, 4
        %v273 = vadd.f32 %v271, %v272
        %v274 = vrot.slane %v273, 2
        %v275 = vadd.f32 %v273, %v274
        %v276 = vrot.slane %v275, 1
        %v277 = vadd.f32 %v275, %v276
        %v278 = vsel %vm242, %v211, 0.0
        %v279 = vrot.slane %v278, 4
        %v280 = vadd.f32 %v278, %v279
        %v281 = vrot.slane %v280, 2
        %v282 = vadd.f32 %v280, %v281
        %v283 = vrot.slane %v282, 1
        %v284 = vadd.f32 %v282, %v283
        %v285 = vsel %vm242, %v212, 0.0
        %v286 = vrot.slane %v285, 4
        %v287 = vadd.f32 %v285, %v286
        %v288 = vrot.slane %v287, 2
        %v289 = vadd.f32 %v287, %v288
        %v290 = vrot.slane %v289, 1
        %v291 = vadd.f32 %v289, %v290
        %v292 = vsel %vm242, %v213, 0.0
        %v293 = vrot.slane %v292, 4
        %v294 = vadd.f32 %v292, %v293
        %v295 = vrot.slane %v294, 2
        %v296 = vadd.f32 %v294, %v295
        %v297 = vrot.slane %v296, 1
        %v298 = vadd.f32 %v296, %v297
        %v299 = vsel %vm242, %v218, 0.0
        %v300 = vrot.slane %v299, 4
        %v301 = vadd.f32 %v299, %v300
        %v302 = vrot.slane %v301, 2
        %v303 = vadd.f32 %v301, %v302
        %v304 = vrot.slane %v303, 1
        %v305 = vadd.f32 %v303, %v304
        %v306 = vsel %vm242, %v219, 0.0
        %v307 = vrot.slane %v306, 4
        %v308 = vadd.f32 %v306, %v307
        %v309 = vrot.slane %v308, 2
        %v310 = vadd.f32 %v308, %v309
        %v311 = vrot.slane %v310, 1
        %v312 = vadd.f32 %v310, %v311
        %v313 = vsel %vm242, %v220, 0.0
        %v314 = vrot.slane %v313, 4
        %v315 = vadd.f32 %v313, %v314
        %v316 = vrot.slane %v315, 2
        %v317 = vadd.f32 %v315, %v316
        %v318 = vrot.slane %v317, 1
        %v319 = vadd.f32 %v317, %v318
        %v320 = vsel %vm242, %v221, 0.0
        %v321 = vrot.slane %v320, 4
        %v322 = vadd.f32 %v320, %v321
        %v323 = vrot.slane %v322, 2
        %v324 = vadd.f32 %v322, %v323
        %v325 = vrot.slane %v324, 1
        %v326 = vadd.f32 %v324, %v325
        %v327 = vsel %vm242, %v222, 0.0
        %v328 = vrot.slane %v327, 4
        %v329 = vadd.f32 %v327, %v328
        %v330 = vrot.slane %v329, 2
        %v331 = vadd.f32 %v329, %v330
        %v332 = vrot.slane %v331, 1
        %v333 = vadd.f32 %v331, %v332
        %v334 = vsel %vm242, %v223, 0.0
        %v335 = vrot.slane %v334, 4
        %v336 = vadd.f32 %v334, %v335
        %v337 = vrot.slane %v336, 2
        %v338 = vadd.f32 %v336, %v337
        %v339 = vrot.slane %v338, 1
        %v340 = vadd.f32 %v338, %v339
        %v341 = vsel %vm242, %v224, 0.0
        %v342 = vrot.slane %v341, 4
        %v343 = vadd.f32 %v341, %v342
        %v344 = vrot.slane %v343, 2
        %v345 = vadd.f32 %v343, %v344
        %v346 = vrot.slane %v345, 1
        %v347 = vadd.f32 %v345, %v346
        %v348 = vsel %vm242, %v225, 0.0
        %v349 = vrot.slane %v348, 4
        %v350 = vadd.f32 %v348, %v349
        %v351 = vrot.slane %v350, 2
        %v352 = vadd.f32 %v350, %v351
        %v353 = vrot.slane %v352, 1
        %v354 = vadd.f32 %v352, %v353
        %v355 = vrcp.pop 4.0
        %v356 = vmul.f32 4.0, %v355
        %v357 = vsub.f32 1.0, %v356
        %v358 = vmul.f32 %v355, %v357
        %v359 = vadd.f32 %v355, %v358
        %vm360 = vweird.f32 %v355
        %v361 = vsel %vm360, %v355, %v359
        %v362 = vmul.f32 %v249, %v361
        %v363 = vmul.f32 %v256, %v361
        %v364 = vmul.f32 %v263, %v361
        %v365 = vmul.f32 %v270, %v361
        %v366 = vmul.f32 %v277, %v361
        %v367 = vmul.f32 %v284, %v361
        %v368 = vmul.f32 %v291, %v361
        %v369 = vmul.f32 %v298, %v361
        %v370 = vmul.f32 %v305, %v361
        %v371 = vmul.f32 %v312, %v361
        %v372 = vmul.f32 %v319, %v361
        %v373 = vmul.f32 %v326, %v361
        %v374 = vmul.f32 %v333, %v361
        %v375 = vmul.f32 %v340, %v361
        %v376 = vmul.f32 %v347, %v361
        %v377 = vmul.f32 %v354, %v361
        %v394 = vrot.slane %v363, 4
        %v395 = vrot.slane %v365, 4
        %v396 = vrot.slane %v367, 4
        %v397 = vrot.slane %v369, 4
        %v398 = vrot.slane %v371, 4
        %v399 = vrot.slane %v373, 4
        %v400 = vrot.slane %v375, 4
        %v401 = vrot.slane %v377, 4
        %v402 = vsel %vm242, %v362, %v394
        %v403 = vsel %vm242, %v364, %v395
        %v404 = vsel %vm242, %v366, %v396
        %v405 = vsel %vm242, %v368, %v397
        %v406 = vsel %vm242, %v370, %v398
        %v407 = vsel %vm242, %v372, %v399
        %v408 = vsel %vm242, %v374, %v400
        %v409 = vsel %vm242, %v376, %v401
        %v418 = vsub.f32 %v182, %v402
        %v419 = vsub.f32 %v183, %v403
        %v420 = vsub.f32 %v184, %v404
        %v421 = vsub.f32 %v185, %v405
        %v422 = vsub.f32 %v186, %v406
        %v423 = vsub.f32 %v187, %v407
        %v424 = vsub.f32 %v188, %v408
        %v425 = vsub.f32 %v189, %v409
        %v426 = vmul.f32 %v418, %v418
        %v427 = vmul.f32 %v419, %v419
        %v428 = vmul.f32 %v420, %v420
        %v429 = vmul.f32 %v421, %v421
        %v430 = vmul.f32 %v422, %v422
        %v431 = vmul.f32 %v423, %v423
        %v432 = vmul.f32 %v424, %v424
        %v433 = vmul.f32 %v425, %v425
        %442 = vst [vmem:[#allocation1] ss:$2 sm:$0xff] %v426
        %s443 = scalar_lea.vmem [#allocation1], 16
        %444 = vst [vmem:[%s443] ss:$2 sm:$0xff] %v427
        %s445 = scalar_lea.vmem [#allocation1], 32
        %446 = vst [vmem:[%s445] ss:$2 sm:$0xff] %v428
        %s447 = scalar_lea.vmem [#allocation1], 48
        %448 = vst [vmem:[%s447] ss:$2 sm:$0xff] %v429
        %v449 = vld.sshfl [vmem:[#allocation1] sm:$0xff pattern:$0x75316420]
        %v450 = vld.sshfl [vmem:[#allocation1 + $0x8] sm:$0xff pattern:$0x75316420]
        %v451 = vld.sshfl [vmem:[#allocation1 + $0x10] sm:$0xff pattern:$0x75316420]
        %v452 = vld.sshfl [vmem:[#allocation1 + $0x18] sm:$0xff pattern:$0x75316420]
        %v453 = vld.sshfl [vmem:[#allocation1 + $0x20] sm:$0xff pattern:$0x75316420]
        %v454 = vld.sshfl [vmem:[#allocation1 + $0x28] sm:$0xff pattern:$0x75316420]
        %v455 = vld.sshfl [vmem:[#allocation1 + $0x30] sm:$0xff pattern:$0x75316420]
        %v456 = vld.sshfl [vmem:[#allocation1 + $0x38] sm:$0xff pattern:$0x75316420]
        %457 = vst [vmem:[#allocation1] ss:$2 sm:$0xff] %v430
        %458 = vst [vmem:[%s443] ss:$2 sm:$0xff] %v431
        %459 = vst [vmem:[%s445] ss:$2 sm:$0xff] %v432
        %460 = vst [vmem:[%s447] ss:$2 sm:$0xff] %v433
        %v461 = vld.sshfl [vmem:[#allocation1] sm:$0xff pattern:$0x75316420]
        %v462 = vld.sshfl [vmem:[#allocation1 + $0x8] sm:$0xff pattern:$0x75316420]
        %v463 = vld.sshfl [vmem:[#allocation1 + $0x10] sm:$0xff pattern:$0x75316420]
        %v464 = vld.sshfl [vmem:[#allocation1 + $0x18] sm:$0xff pattern:$0x75316420]
        %v465 = vld.sshfl [vmem:[#allocation1 + $0x20] sm:$0xff pattern:$0x75316420]
        %v466 = vld.sshfl [vmem:[#allocation1 + $0x28] sm:$0xff pattern:$0x75316420]
        %v467 = vld.sshfl [vmem:[#allocation1 + $0x30] sm:$0xff pattern:$0x75316420]
        %v468 = vld.sshfl [vmem:[#allocation1 + $0x38] sm:$0xff pattern:$0x75316420]
        %v485 = vsel %vm242, %v449, 0.0
        %v486 = vrot.slane %v485, 4
        %v487 = vadd.f32 %v485, %v486
        %v488 = vrot.slane %v487, 2
        %v489 = vadd.f32 %v487, %v488
        %v490 = vrot.slane %v489, 1
        %v491 = vadd.f32 %v489, %v490
        %v492 = vsel %vm242, %v450, 0.0
        %v493 = vrot.slane %v492, 4
        %v494 = vadd.f32 %v492, %v493
        %v495 = vrot.slane %v494, 2
        %v496 = vadd.f32 %v494, %v495
        %v497 = vrot.slane %v496, 1
        %v498 = vadd.f32 %v496, %v497
        %v499 = vsel %vm242, %v451, 0.0
        %v500 = vrot.slane %v499, 4
        %v501 = vadd.f32 %v499, %v500
        %v502 = vrot.slane %v501, 2
        %v503 = vadd.f32 %v501, %v502
        %v504 = vrot.slane %v503, 1
        %v505 = vadd.f32 %v503, %v504
        %v506 = vsel %vm242, %v452, 0.0
        %v507 = vrot.slane %v506, 4
        %v508 = vadd.f32 %v506, %v507
        %v509 = vrot.slane %v508, 2
        %v510 = vadd.f32 %v508, %v509
        %v511 = vrot.slane %v510, 1
        %v512 = vadd.f32 %v510, %v511
        %v513 = vsel %vm242, %v453, 0.0
        %v514 = vrot.slane %v513, 4
        %v515 = vadd.f32 %v513, %v514
        %v516 = vrot.slane %v515, 2
        %v517 = vadd.f32 %v515, %v516
        %v518 = vrot.slane %v517, 1
        %v519 = vadd.f32 %v517, %v518
        %v520 = vsel %vm242, %v454, 0.0
        %v521 = vrot.slane %v520, 4
        %v522 = vadd.f32 %v520, %v521
        %v523 = vrot.slane %v522, 2
        %v524 = vadd.f32 %v522, %v523
        %v525 = vrot.slane %v524, 1
        %v526 = vadd.f32 %v524, %v525
        %v527 = vsel %vm242, %v455, 0.0
        %v528 = vrot.slane %v527, 4
        %v529 = vadd.f32 %v527, %v528
        %v530 = vrot.slane %v529, 2
        %v531 = vadd.f32 %v529, %v530
        %v532 = vrot.slane %v531, 1
        %v533 = vadd.f32 %v531, %v532
        %v534 = vsel %vm242, %v456, 0.0
        %v535 = vrot.slane %v534, 4
        %v536 = vadd.f32 %v534, %v535
        %v537 = vrot.slane %v536, 2
        %v538 = vadd.f32 %v536, %v537
        %v539 = vrot.slane %v538, 1
        %v540 = vadd.f32 %v538, %v539
        %v541 = vsel %vm242, %v461, 0.0
        %v542 = vrot.slane %v541, 4
        %v543 = vadd.f32 %v541, %v542
        %v544 = vrot.slane %v543, 2
        %v545 = vadd.f32 %v543, %v544
        %v546 = vrot.slane %v545, 1
        %v547 = vadd.f32 %v545, %v546
        %v548 = vsel %vm242, %v462, 0.0
        %v549 = vrot.slane %v548, 4
        %v550 = vadd.f32 %v548, %v549
        %v551 = vrot.slane %v550, 2
        %v552 = vadd.f32 %v550, %v551
        %v553 = vrot.slane %v552, 1
        %v554 = vadd.f32 %v552, %v553
        %v555 = vsel %vm242, %v463, 0.0
        %v556 = vrot.slane %v555, 4
        %v557 = vadd.f32 %v555, %v556
        %v558 = vrot.slane %v557, 2
        %v559 = vadd.f32 %v557, %v558
        %v560 = vrot.slane %v559, 1
        %v561 = vadd.f32 %v559, %v560
        %v562 = vsel %vm242, %v464, 0.0
        %v563 = vrot.slane %v562, 4
        %v564 = vadd.f32 %v562, %v563
        %v565 = vrot.slane %v564, 2
        %v566 = vadd.f32 %v564, %v565
        %v567 = vrot.slane %v566, 1
        %v568 = vadd.f32 %v566, %v567
        %v569 = vsel %vm242, %v465, 0.0
        %v570 = vrot.slane %v569, 4
        %v571 = vadd.f32 %v569, %v570
        %v572 = vrot.slane %v571, 2
        %v573 = vadd.f32 %v571, %v572
        %v574 = vrot.slane %v573, 1
        %v575 = vadd.f32 %v573, %v574
        %v576 = vsel %vm242, %v466, 0.0
        %v577 = vrot.slane %v576, 4
        %v578 = vadd.f32 %v576, %v577
        %v579 = vrot.slane %v578, 2
        %v580 = vadd.f32 %v578, %v579
        %v581 = vrot.slane %v580, 1
        %v582 = vadd.f32 %v580, %v581
        %v583 = vsel %vm242, %v467, 0.0
        %v584 = vrot.slane %v583, 4
        %v585 = vadd.f32 %v583, %v584
        %v586 = vrot.slane %v585, 2
        %v587 = vadd.f32 %v585, %v586
        %v588 = vrot.slane %v587, 1
        %v589 = vadd.f32 %v587, %v588
        %v590 = vsel %vm242, %v468, 0.0
        %v591 = vrot.slane %v590, 4
        %v592 = vadd.f32 %v590, %v591
        %v593 = vrot.slane %v592, 2
        %v594 = vadd.f32 %v592, %v593
        %v595 = vrot.slane %v594, 1
        %v596 = vadd.f32 %v594, %v595
        %v597 = vmul.f32 %v491, %v361
        %v598 = vmul.f32 %v498, %v361
        %v599 = vmul.f32 %v505, %v361
        %v600 = vmul.f32 %v512, %v361
        %v601 = vmul.f32 %v519, %v361
        %v602 = vmul.f32 %v526, %v361
        %v603 = vmul.f32 %v533, %v361
        %v604 = vmul.f32 %v540, %v361
        %v605 = vmul.f32 %v547, %v361
        %v606 = vmul.f32 %v554, %v361
        %v607 = vmul.f32 %v561, %v361
        %v608 = vmul.f32 %v568, %v361
        %v609 = vmul.f32 %v575, %v361
        %v610 = vmul.f32 %v582, %v361
        %v611 = vmul.f32 %v589, %v361
        %v612 = vmul.f32 %v596, %v361
        %v613 = vadd.f32 %v597, 1e-05
        %v614 = vadd.f32 %v598, 1e-05
        %v615 = vadd.f32 %v599, 1e-05
        %v616 = vadd.f32 %v600, 1e-05
        %v617 = vadd.f32 %v601, 1e-05
        %v618 = vadd.f32 %v602, 1e-05
        %v619 = vadd.f32 %v603, 1e-05
        %v620 = vadd.f32 %v604, 1e-05
        %v621 = vadd.f32 %v605, 1e-05
        %v622 = vadd.f32 %v606, 1e-05
        %v623 = vadd.f32 %v607, 1e-05
        %v624 = vadd.f32 %v608, 1e-05
        %v625 = vadd.f32 %v609, 1e-05
        %v626 = vadd.f32 %v610, 1e-05
        %v627 = vadd.f32 %v611, 1e-05
        %v628 = vadd.f32 %v612, 1e-05
        %v629 = vrsqrt.pop %v613
        %v630 = vmul.f32 %v629, %v613
        %v631 = vmul.f32 %v630, %v629
        %v632 = vmul.f32 0.5, %v631
        %v633 = vsub.f32 1.5, %v632
        %v634 = vmul.f32 %v629, %v633
        %vm635 = vweird.f32 %v613
        %vm636 = vweird.f32 %v629
        %vm637 = vmor %vm635, %vm636
        %v638 = vsel %vm637, %v629, %v634
        %v639 = vrsqrt.pop %v614
        %v640 = vmul.f32 %v639, %v614
        %v641 = vmul.f32 %v640, %v639
        %v642 = vmul.f32 0.5, %v641
        %v643 = vsub.f32 1.5, %v642
        %v644 = vmul.f32 %v639, %v643
        %vm645 = vweird.f32 %v614
        %vm646 = vweird.f32 %v639
        %vm647 = vmor %vm645, %vm646
        %v648 = vsel %vm647, %v639, %v644
        %v649 = vrsqrt.pop %v615
        %v650 = vmul.f32 %v649, %v615
        %v651 = vmul.f32 %v650, %v649
        %v652 = vmul.f32 0.5, %v651
        %v653 = vsub.f32 1.5, %v652
        %v654 = vmul.f32 %v649, %v653
        %vm655 = vweird.f32 %v615
        %vm656 = vweird.f32 %v649
        %vm657 = vmor %vm655, %vm656
        %v658 = vsel %vm657, %v649, %v654
        %v659 = vrsqrt.pop %v616
        %v660 = vmul.f32 %v659, %v616
        %v661 = vmul.f32 %v660, %v659
        %v662 = vmul.f32 0.5, %v661
        %v663 = vsub.f32 1.5, %v662
        %v664 = vmul.f32 %v659, %v663
        %vm665 = vweird.f32 %v616
        %vm666 = vweird.f32 %v659
        %vm667 = vmor %vm665, %vm666
        %v668 = vsel %vm667, %v659, %v664
        %v669 = vrsqrt.pop %v617
        %v670 = vmul.f32 %v669, %v617
        %v671 = vmul.f32 %v670, %v669
        %v672 = vmul.f32 0.5, %v671
        %v673 = vsub.f32 1.5, %v672
        %v674 = vmul.f32 %v669, %v673
        %vm675 = vweird.f32 %v617
        %vm676 = vweird.f32 %v669
        %vm677 = vmor %vm675, %vm676
        %v678 = vsel %vm677, %v669, %v674
        %v679 = vrsqrt.pop %v618
        %v680 = vmul.f32 %v679, %v618
        %v681 = vmul.f32 %v680, %v679
        %v682 = vmul.f32 0.5, %v681
        %v683 = vsub.f32 1.5, %v682
        %v684 = vmul.f32 %v679, %v683
        %vm685 = vweird.f32 %v618
        %vm686 = vweird.f32 %v679
        %vm687 = vmor %vm685, %vm686
        %v688 = vsel %vm687, %v679, %v684
        %v689 = vrsqrt.pop %v619
        %v690 = vmul.f32 %v689, %v619
        %v691 = vmul.f32 %v690, %v689
        %v692 = vmul.f32 0.5, %v691
        %v693 = vsub.f32 1.5, %v692
        %v694 = vmul.f32 %v689, %v693
        %vm695 = vweird.f32 %v619
        %vm696 = vweird.f32 %v689
        %vm697 = vmor %vm695, %vm696
        %v698 = vsel %vm697, %v689, %v694
        %v699 = vrsqrt.pop %v620
        %v700 = vmul.f32 %v699, %v620
        %v701 = vmul.f32 %v700, %v699
        %v702 = vmul.f32 0.5, %v701
        %v703 = vsub.f32 1.5, %v702
        %v704 = vmul.f32 %v699, %v703
        %vm705 = vweird.f32 %v620
        %vm706 = vweird.f32 %v699
        %vm707 = vmor %vm705, %vm706
        %v708 = vsel %vm707, %v699, %v704
        %v709 = vrsqrt.pop %v621
        %v710 = vmul.f32 %v709, %v621
        %v711 = vmul.f32 %v710, %v709
        %v712 = vmul.f32 0.5, %v711
        %v713 = vsub.f32 1.5, %v712
        %v714 = vmul.f32 %v709, %v713
        %vm715 = vweird.f32 %v621
        %vm716 = vweird.f32 %v709
        %vm717 = vmor %vm715, %vm716
        %v718 = vsel %vm717, %v709, %v714
        %v719 = vrsqrt.pop %v622
        %v720 = vmul.f32 %v719, %v622
        %v721 = vmul.f32 %v720, %v719
        %v722 = vmul.f32 0.5, %v721
        %v723 = vsub.f32 1.5, %v722
        %v724 = vmul.f32 %v719, %v723
        %vm725 = vweird.f32 %v622
        %vm726 = vweird.f32 %v719
        %vm727 = vmor %vm725, %vm726
        %v728 = vsel %vm727, %v719, %v724
        %v729 = vrsqrt.pop %v623
        %v730 = vmul.f32 %v729, %v623
        %v731 = vmul.f32 %v730, %v729
        %v732 = vmul.f32 0.5, %v731
        %v733 = vsub.f32 1.5, %v732
        %v734 = vmul.f32 %v729, %v733
        %vm735 = vweird.f32 %v623
        %vm736 = vweird.f32 %v729
        %vm737 = vmor %vm735, %vm736
        %v738 = vsel %vm737, %v729, %v734
        %v739 = vrsqrt.pop %v624
        %v740 = vmul.f32 %v739, %v624
        %v741 = vmul.f32 %v740, %v739
        %v742 = vmul.f32 0.5, %v741
        %v743 = vsub.f32 1.5, %v742
        %v744 = vmul.f32 %v739, %v743
        %vm745 = vweird.f32 %v624
        %vm746 = vweird.f32 %v739
        %vm747 = vmor %vm745, %vm746
        %v748 = vsel %vm747, %v739, %v744
        %v749 = vrsqrt.pop %v625
        %v750 = vmul.f32 %v749, %v625
        %v751 = vmul.f32 %v750, %v749
        %v752 = vmul.f32 0.5, %v751
        %v753 = vsub.f32 1.5, %v752
        %v754 = vmul.f32 %v749, %v753
        %vm755 = vweird.f32 %v625
        %vm756 = vweird.f32 %v749
        %vm757 = vmor %vm755, %vm756
        %v758 = vsel %vm757, %v749, %v754
        %v759 = vrsqrt.pop %v626
        %v760 = vmul.f32 %v759, %v626
        %v761 = vmul.f32 %v760, %v759
        %v762 = vmul.f32 0.5, %v761
        %v763 = vsub.f32 1.5, %v762
        %v764 = vmul.f32 %v759, %v763
        %vm765 = vweird.f32 %v626
        %vm766 = vweird.f32 %v759
        %vm767 = vmor %vm765, %vm766
        %v768 = vsel %vm767, %v759, %v764
        %v769 = vrsqrt.pop %v627
        %v770 = vmul.f32 %v769, %v627
        %v771 = vmul.f32 %v770, %v769
        %v772 = vmul.f32 0.5, %v771
        %v773 = vsub.f32 1.5, %v772
        %v774 = vmul.f32 %v769, %v773
        %vm775 = vweird.f32 %v627
        %vm776 = vweird.f32 %v769
        %vm777 = vmor %vm775, %vm776
        %v778 = vsel %vm777, %v769, %v774
        %v779 = vrsqrt.pop %v628
        %v780 = vmul.f32 %v779, %v628
        %v781 = vmul.f32 %v780, %v779
        %v782 = vmul.f32 0.5, %v781
        %v783 = vsub.f32 1.5, %v782
        %v784 = vmul.f32 %v779, %v783
        %vm785 = vweird.f32 %v628
        %vm786 = vweird.f32 %v779
        %vm787 = vmor %vm785, %vm786
        %v788 = vsel %vm787, %v779, %v784
        %v805 = vrot.slane %v648, 4
        %v806 = vrot.slane %v668, 4
        %v807 = vrot.slane %v688, 4
        %v808 = vrot.slane %v708, 4
        %v809 = vrot.slane %v728, 4
        %v810 = vrot.slane %v748, 4
        %v811 = vrot.slane %v768, 4
        %v812 = vrot.slane %v788, 4
        %v813 = vsel %vm242, %v638, %v805
        %v814 = vsel %vm242, %v658, %v806
        %v815 = vsel %vm242, %v678, %v807
        %v816 = vsel %vm242, %v698, %v808
        %v817 = vsel %vm242, %v718, %v809
        %v818 = vsel %vm242, %v738, %v810
        %v819 = vsel %vm242, %v758, %v811
        %v820 = vsel %vm242, %v778, %v812
        %v829 = vmul.f32 %v418, %v813
        %v830 = vmul.f32 %v419, %v814
        %v831 = vmul.f32 %v420, %v815
        %v832 = vmul.f32 %v421, %v816
        %v833 = vmul.f32 %v422, %v817
        %v834 = vmul.f32 %v423, %v818
        %v835 = vmul.f32 %v424, %v819
        %v836 = vmul.f32 %v425, %v820
        %838 = vset.pattern.permute.xlu0 0
        %839 = vperm.xlu0 %838, %v190
        %v840 = vpop.permute.xlu0 %839
        %v842 = vunpack.c.l.s4 839922192
        %v843 = vunpack.c.0.s8 %v842
        %v844 = vperm.slane %v840, %v843
        %v846 = vmul.f32 %v829, %v844
        %v847 = vmul.f32 %v830, %v844
        %v848 = vmul.f32 %v831, %v844
        %v849 = vmul.f32 %v832, %v844
        %v850 = vmul.f32 %v833, %v844
        %v851 = vmul.f32 %v834, %v844
        %v852 = vmul.f32 %v835, %v844
        %v853 = vmul.f32 %v836, %v844
        %854 = vst [vmem:[%s179] sm:$0xff] %v846
        %855 = vst [vmem:[%s179 + $0x8] sm:$0xff] %v847
        %856 = vst [vmem:[%s179 + $0x10] sm:$0xff] %v848
        %857 = vst [vmem:[%s179 + $0x18] sm:$0xff] %v849
        %858 = vst [vmem:[%s179 + $0x20] sm:$0xff] %v850
        %859 = vst [vmem:[%s179 + $0x28] sm:$0xff] %v851
        %860 = vst [vmem:[%s179 + $0x30] sm:$0xff] %v852
        %861 = vst [vmem:[%s179 + $0x38] sm:$0xff] %v853
        %s862 = sand.u32 %s90, 1
        %s863 = scalar_lea.sflag [#allocation4], %s862
        %s864 = sand.u32 %s90, 1
        %s865 = smul.addr %s864, 64
        %s866 = scalar_lea.vmem [#allocation5], %s865
        // Predicated region
        $region33: #{tpu_custom_call.1} parent=27 // pred_check
          %p867 = pneg %p100
        $region34: #{tpu_custom_call.1} parent=27 // pred_check_branch
          %869 = sbr.rel (%p867) target = $region36
        $region35: #{tpu_custom_call.1} parent=27 // pred_region
          %s870 = smul.u32 16, %s24
          %872 = vsyncadd %s863, 0
          %s873 = smul.addr %s23, 16
          %s874 = sadd.s32 %s870, %s873
          %s875 = smul.addr %s874, 4
          %s876 = scalar_lea.hbm %s2, %s875
          %s878 = sshll.u32 %s866, 4
          %s879 = int_to_ptr.vmem [resolvable:$true] %s878
          %s880 = sshll.u32 %s876, 4
          %s881 = int_to_ptr.hbm [resolvable:$true] %s880
          %883 = dma.vmem_to_hbm [thread:$0]  %s879, 1024, %s881, %s863
        $region36: #{tpu_custom_call.1} parent=27 // pred_fallthru
          _
      $region28: #{tpu_custom_call.1} parent=5 // pred_fallthru
        _
      %p884 = scmp.le.s32.totalorder 2, %s14
      // Predicated region
      $region37: #{tpu_custom_call.1} parent=5 // pred_check
        %p885 = pneg %p884
      $region38: #{tpu_custom_call.1} parent=5 // pred_check_branch
        %887 = sbr.rel (%p885) target = $region40
      $region39: #{tpu_custom_call.1} parent=5 // pred_region
        %s888 = ssub.s32 %s14, 2
        // Predicated region
        $region41: #{tpu_custom_call.1} parent=39 // pred_check
          %p889 = pneg %p106
        $region42: #{tpu_custom_call.1} parent=39 // pred_check_branch
          %891 = sbr.rel (%p889) target = $region44
        $region43: #{tpu_custom_call.1} parent=39 // pred_region
          %s892 = sand.u32 %s91, 1
          %s893 = scalar_lea.sflag [#allocation4], %s892
          %s894 = sand.u32 %s91, 1
          %s895 = smul.addr %s894, 64
          %s896 = scalar_lea.vmem [#allocation5], %s895
          %898 = dma.done %s893, 1024
        $region44: #{tpu_custom_call.1} parent=39 // pred_fallthru
          _
      $region40: #{tpu_custom_call.1} parent=5 // pred_fallthru
        _
    $region6: #{tpu_custom_call.1} parent=1 // loop_footer
      %s18 = sadd.s32 1, %s14
    $region7: #{tpu_custom_call.1} parent=1 // loop_footer_branch
      %13 = sbr.rel target = $region3
    $region8: #{tpu_custom_call.1} parent=1 // loop_exit
      _
    %899 = vsyncpa [#allocation3], 1
    %s900 = scalar_lea.sflag [#allocation3], 1
    %901 = vsyncpa %s900, 1
    %902 = vsyncpa [#allocation4], 1
    %s903 = scalar_lea.sflag [#allocation4], 1
    %904 = vsyncpa %s903, 1

</llo_original>
